<compile_context>
chip_gen: v7x
topology: tpu7x:2x2x1
jax: 0.10.0
libtpu: 0.0.40
codegen_flags: <defaults>
</compile_context>

<pallas_src>
import functools

import jax
import jax.numpy as jnp
from jax.experimental import pallas as pl
from jax.experimental.pallas import tpu as pltpu


def _round_up(x, m):
    return (x + m - 1) // m * m


def _vmem_capacity_bytes():
    try:
        return int(pltpu.get_tpu_info().vmem_capacity_bytes)
    except Exception:
        return 64 * 1024 * 1024  # conservative fallback (v7x per-TC VMEM)


def _spiralconv_kernel(s_ref, w_ref, b_ref, o_ref, *, num_pts, activation):
    # s_ref: (TM, K)     gathered spirals tile (compute dtype)
    # w_ref: (K, out_c)  linear weight, transposed vs PyTorch (out_c, K)
    # b_ref: (1, out_c)  bias (f32)
    # o_ref: (TM, out_c) output tile (out dtype)
    tm = o_ref.shape[0]

    acc = jnp.dot(s_ref[...], w_ref[...], preferred_element_type=jnp.float32)
    acc = acc + b_ref[...]

    if activation == "elu":
        # exp(min(x,0)) - 1 avoids relying on expm1 lowering and avoids inf on
        # the discarded positive branch.
        act = jnp.where(acc > 0, acc, jnp.exp(jnp.minimum(acc, 0.0)) - 1.0)
    elif activation == "relu":
        act = jnp.maximum(acc, 0.0)
    elif activation == "leaky_relu":
        act = jnp.where(acc > 0, acc, 0.02 * acc)  # module uses LeakyReLU(0.02)
    elif activation == "sigmoid":
        act = pl.reciprocal(1.0 + jnp.exp(-acc), approx=True)
    elif activation == "tanh":
        act = jnp.tanh(acc)
    elif activation == "identity":
        act = acc
    else:
        raise NotImplementedError(activation)

    # zero_padding: zero out the last point (index num_pts - 1) of every batch.
    # Global row r -> point index r % num_pts; computed on a (TM, 1) column and
    # broadcast across the lane (out-channel) dim.
    row0 = pl.program_id(0) * tm
    local = jax.lax.broadcasted_iota(jnp.int32, (tm, 1), 0)
    keep = ((row0 + local) % num_pts) != (num_pts - 1)
    o_ref[...] = jnp.where(keep, act, 0.0).astype(o_ref.dtype)


def spiral_conv(x, spiral_adj, weight_t, bias, *, activation="elu",
                compute_dtype=jnp.bfloat16, out_dtype=None, tm=None):
    """Forward pass equivalent to SpiralConv.forward.

    x:          (B, P, F) float32
    spiral_adj: (B, P, S) int32 indices into the P axis
    weight_t:   (S*F, out_c) float32   (PyTorch conv.weight transposed)
    bias:       (out_c,) float32
    returns:    (B, P, out_c) in `out_dtype` (defaults to `compute_dtype`).
                NOTE: bf16 compute/output deviates slightly from the f32
                PyTorch module; pass compute_dtype=out_dtype=jnp.float32 for
                full f32 parity.
    """
    B, P, F = x.shape
    S = spiral_adj.shape[-1]
    K, out_c = weight_t.shape
    assert K == S * F
    out_dtype = compute_dtype if out_dtype is None else out_dtype
    M = B * P

    # ---- glue: data-dependent spiral gather in plain JAX (see TODO above) ----
    xg = x.astype(compute_dtype)
    gidx = (jnp.arange(B, dtype=jnp.int32)[:, None, None] * P
            + spiral_adj.astype(jnp.int32)).reshape(-1)          # (B*P*S,)
    spirals = jnp.take(xg.reshape(M, F), gidx, axis=0).reshape(M, K)

    isz_in = jnp.dtype(compute_dtype).itemsize
    isz_out = jnp.dtype(out_dtype).itemsize

    # ---- generation-aware VMEM budget and tile choice ----
    vmem_phys = _vmem_capacity_bytes()
    budget = int(0.70 * vmem_phys)                 # ~45 MiB on v7x, ~90 MiB v5e/v6e

    fixed = 2 * K * out_c * isz_in + 2 * out_c * 4          # weight + bias (2 bufs)
    per_row = 2 * (K * isz_in + out_c * isz_out)            # spirals + out tiles (2 bufs)

    if tm is None:
        tm_fit = max(8, (budget - fixed) // max(per_row, 1))
        tm = min(2048, tm_fit)                               # big tiles: fewer grid steps
        if M >= 4 * 512:
            tm = min(tm, -(-M // 4))                         # keep >= ~4 steps (v7x 2 TCs)
    tm = int(tm)
    if tm >= M:
        TM = M                                               # single (possibly unaligned) block
    else:
        TM = max(16, (tm // 16) * 16)                        # sublane-friendly for bf16
    grid = (pl.cdiv(M, TM),)

    w = weight_t.astype(compute_dtype)
    b = bias.astype(jnp.float32).reshape(1, out_c)

    footprint = fixed + per_row * TM
    vmem_limit = int(min(budget, max(int(1.5 * footprint), 8 * 1024 * 1024)))

    cost = pl.CostEstimate(
        flops=int(2 * M * K * out_c),
        transcendentals=int(M * out_c) if activation in ("elu", "sigmoid", "tanh") else 0,
        bytes_accessed=int(M * K * isz_in + K * out_c * isz_in + out_c * 4
                           + M * out_c * isz_out),
    )

    kernel = functools.partial(_spiralconv_kernel, num_pts=P, activation=activation)

    out = pl.pallas_call(
        kernel,
        out_shape=jax.ShapeDtypeStruct((M, out_c), out_dtype),
        grid_spec=pltpu.PrefetchScalarGridSpec(
            num_scalar_prefetch=0,
            grid=grid,
            in_specs=[
                pl.BlockSpec((TM, K), lambda i: (i, 0)),      # spirals (tiled over M)
                pl.BlockSpec((K, out_c), lambda i: (0, 0)),   # weight (resident)
                pl.BlockSpec((1, out_c), lambda i: (0, 0)),   # bias   (resident)
            ],
            out_specs=pl.BlockSpec((TM, out_c), lambda i: (i, 0)),
        ),
        compiler_params=pltpu.CompilerParams(
            dimension_semantics=("parallel",),
            vmem_limit_bytes=vmem_limit,
        ),
        cost_estimate=cost,
    )(spirals, w, b)

    return out.reshape(B, P, out_c)


def _reference(x, spiral_adj, weight_t, bias, *, compute_dtype=jnp.bfloat16):
    """Pure-JAX reference with the same bf16-input / f32-accumulate numerics,
    f32 output (no final downcast)."""
    B, P, F = x.shape
    S = spiral_adj.shape[-1]
    gidx = (jnp.arange(B, dtype=jnp.int32)[:, None, None] * P
            + spiral_adj.astype(jnp.int32)).reshape(-1)
    spirals = jnp.take(x.astype(compute_dtype).reshape(B * P, F), gidx,
                       axis=0).reshape(B * P, S * F)
    out = jnp.dot(spirals, weight_t.astype(compute_dtype),
                  preferred_element_type=jnp.float32) + bias
    out = jnp.where(out > 0, out, jnp.exp(jnp.minimum(out, 0.0)) - 1.0)  # ELU
    out = out.reshape(B, P, -1)
    zero_padding = jnp.ones((1, P, 1), jnp.float32).at[0, -1, 0].set(0.0)
    return out * zero_padding


if __name__ == "__main__":
    # Small deterministic example consistent with the module's forward:
    #   x: (bsize, num_pts, feats), spiral_adj: (bsize, num_pts, spiral_size).
    # tm=128 with M=256 exercises a multi-step (grid=2) tiled M axis.
    bsize, num_pts, feats = 2, 128, 8
    spiral_size, out_c = 8, 32

    key = jax.random.PRNGKey(0)
    kx, kadj, kw, kb = jax.random.split(key, 4)

    x = jax.random.normal(kx, (bsize, num_pts, feats), dtype=jnp.float32)
    spiral_adj = jax.random.randint(
        kadj, (bsize, num_pts, spiral_size), 0, num_pts, dtype=jnp.int32
    )

    fan_in = feats * spiral_size
    bound = 1.0 / (fan_in ** 0.5)
    # weight stored transposed: (in_c*spiral_size, out_c)
    weight_t = jax.random.uniform(
        kw, (fan_in, out_c), minval=-bound, maxval=bound, dtype=jnp.float32
    )
    bias = jax.random.uniform(
        kb, (out_c,), minval=-bound, maxval=bound, dtype=jnp.float32
    )

    out = spiral_conv(x, spiral_adj, weight_t, bias, activation="elu", tm=128)
    out = jax.block_until_ready(out)

    ref = _reference(x, spiral_adj, weight_t, bias)
    assert out.shape == (bsize, num_pts, out_c)
    out_f32 = out.astype(jnp.float32)
    # Tolerance covers the bf16 output quantization (~2^-9 relative).
    assert jnp.allclose(out_f32, ref, atol=1e-2, rtol=1e-2), float(
        jnp.max(jnp.abs(out_f32 - ref))
    )

    print("KERNEL_OK")
</pallas_src>

<mosaic_0001>
module attributes {stable_mosaic.version = 11 : i64} {
  func.func @_spiralconv_kernel(%arg0: i32, %arg1: memref<128x64xbf16, #tpu.memory_space<vmem>>, %arg2: memref<64x32xbf16, #tpu.memory_space<vmem>>, %arg3: memref<1x32xf32, #tpu.memory_space<vmem>>, %arg4: memref<128x32xbf16, #tpu.memory_space<vmem>>) attributes {dimension_semantics = [#tpu.dimension_semantics<parallel>], iteration_bounds = array<i64: 2>, scalar_prefetch = 0 : i64, scratch_operands = 0 : i64, tpu.core_type = #tpu.core_type<tc>, window_params = [{transform_indices = @transform_0, window_bounds = array<i64: 128, 64>}, {pipeline_mode = #tpu.pipeline_mode<synchronous>, transform_indices = @transform_1, window_bounds = array<i64: 64, 32>}, {pipeline_mode = #tpu.pipeline_mode<synchronous>, transform_indices = @transform_2, window_bounds = array<i64: 1, 32>}, {transform_indices = @transform_3, window_bounds = array<i64: 128, 32>}]} {
    %c0 = arith.constant 0 : index
    %c0_0 = arith.constant 0 : index
    %0 = vector.load %arg1[%c0, %c0_0] : memref<128x64xbf16, #tpu.memory_space<vmem>>, vector<128x64xbf16>
    %c0_1 = arith.constant 0 : index
    %c0_2 = arith.constant 0 : index
    %1 = vector.load %arg2[%c0_1, %c0_2] : memref<64x32xbf16, #tpu.memory_space<vmem>>, vector<64x32xbf16>
    %cst = arith.constant dense<0.000000e+00> : vector<128x32xf32>
    %2 = tpu.matmul %0, %1, %cst {dimension_numbers = #tpu.dot_dimension_numbers<[1], [0], [0], [1], [0, 0, 1, 1], [], []>} : vector<128x64xbf16>, vector<64x32xbf16>, vector<128x32xf32> -> vector<128x32xf32>
    %c0_3 = arith.constant 0 : index
    %c0_4 = arith.constant 0 : index
    %3 = vector.load %arg3[%c0_3, %c0_4] : memref<1x32xf32, #tpu.memory_space<vmem>>, vector<1x32xf32>
    %4 = vector.broadcast %3 : vector<1x32xf32> to vector<128x32xf32>
    %5 = arith.addf %2, %4 : vector<128x32xf32>
    %cst_5 = arith.constant 0.000000e+00 : f32
    %6 = vector.broadcast %cst_5 : f32 to vector<128x32xf32>
    %7 = arith.cmpf ogt, %5, %6 : vector<128x32xf32>
    %cst_6 = arith.constant 0.000000e+00 : f32
    %8 = vector.broadcast %cst_6 : f32 to vector<128x32xf32>
    %9 = arith.minimumf %5, %8 : vector<128x32xf32>
    %10 = math.exp %9 : vector<128x32xf32>
    %cst_7 = arith.constant 1.000000e+00 : f32
    %11 = vector.broadcast %cst_7 : f32 to vector<128x32xf32>
    %12 = arith.subf %10, %11 : vector<128x32xf32>
    %13 = arith.select %7, %5, %12 : vector<128x32xi1>, vector<128x32xf32>
    %c128_i32 = arith.constant 128 : i32
    %14 = arith.muli %arg0, %c128_i32 : i32
    %15 = tpu.iota {dimensions = array<i32: 0>} : vector<128x1xi32>
    %16 = vector.broadcast %14 : i32 to vector<128x1xi32>
    %17 = arith.addi %16, %15 : vector<128x1xi32>
    %c128_i32_8 = arith.constant 128 : i32
    %c0_i32 = arith.constant 0 : i32
    %18 = arith.cmpi eq, %c128_i32_8, %c0_i32 : i32
    %c1_i32 = arith.constant 1 : i32
    %19 = arith.select %18, %c1_i32, %c128_i32_8 : i32
    %20 = vector.broadcast %19 : i32 to vector<128x1xi32>
    %21 = arith.remsi %17, %20 : vector<128x1xi32>
    %c0_i32_9 = arith.constant 0 : i32
    %22 = vector.broadcast %c0_i32_9 : i32 to vector<128x1xi32>
    %23 = arith.cmpi ne, %21, %22 : vector<128x1xi32>
    %c0_i32_10 = arith.constant 0 : i32
    %24 = vector.broadcast %c0_i32_10 : i32 to vector<128x1xi32>
    %25 = arith.cmpi slt, %21, %24 : vector<128x1xi32>
    %c0_i32_11 = arith.constant 0 : i32
    %26 = arith.cmpi slt, %19, %c0_i32_11 : i32
    %27 = vector.broadcast %26 : i1 to vector<128x1xi1>
    %28 = vector.broadcast %27 : vector<128x1xi1> to vector<128x1xi1>
    %29 = arith.xori %25, %28 : vector<128x1xi1>
    %30 = arith.andi %29, %23 : vector<128x1xi1>
    %31 = vector.broadcast %19 : i32 to vector<128x1xi32>
    %32 = arith.addi %21, %31 : vector<128x1xi32>
    %33 = arith.select %30, %32, %21 : vector<128x1xi1>, vector<128x1xi32>
    %c127_i32 = arith.constant 127 : i32
    %34 = vector.broadcast %c127_i32 : i32 to vector<128x1xi32>
    %35 = arith.cmpi ne, %33, %34 : vector<128x1xi32>
    %cst_12 = arith.constant 0.000000e+00 : f32
    %36 = vector.shape_cast %35 : vector<128x1xi1> to vector<128x1xi1>
    %37 = vector.broadcast %36 : vector<128x1xi1> to vector<128x32xi1>
    %38 = vector.broadcast %cst_12 : f32 to vector<128x32xf32>
    %39 = arith.select %37, %13, %38 : vector<128x32xi1>, vector<128x32xf32>
    %40 = arith.truncf %39 : vector<128x32xf32> to vector<128x32xbf16>
    %c0_13 = arith.constant 0 : index
    %c0_14 = arith.constant 0 : index
    %41 = vector.load %arg4[%c0_13, %c0_14] : memref<128x32xbf16, #tpu.memory_space<vmem>>, vector<128x32xbf16>
    tpu.vector_store %arg4[%c0_13, %c0_14], %40 {strides = array<i32>} : memref<128x32xbf16, #tpu.memory_space<vmem>>, vector<128x32xbf16>,
    return
  }
  func.func @transform_0(%arg0: i32) -> (i32, i32) {
    %c0_i32 = arith.constant 0 : i32
    %c0_i32_0 = arith.constant 0 : i32
    return %arg0, %c0_i32 : i32, i32
  }
  func.func @transform_1(%arg0: i32) -> (i32, i32) {
    %c0_i32 = arith.constant 0 : i32
    %c0_i32_0 = arith.constant 0 : i32
    %c0_i32_1 = arith.constant 0 : i32
    return %c0_i32, %c0_i32_0 : i32, i32
  }
  func.func @transform_2(%arg0: i32) -> (i32, i32) {
    %c0_i32 = arith.constant 0 : i32
    %c0_i32_0 = arith.constant 0 : i32
    %c0_i32_1 = arith.constant 0 : i32
    return %c0_i32, %c0_i32_0 : i32, i32
  }
  func.func @transform_3(%arg0: i32) -> (i32, i32) {
    %c0_i32 = arith.constant 0 : i32
    %c0_i32_0 = arith.constant 0 : i32
    return %arg0, %c0_i32 : i32, i32
  }
}

</mosaic_0001>

<llo_original>
// kernel: tpu_custom_call.1
$region0: #{tpu_custom_call.1}
  #allocation0 [shape = 'u32[]', space=smem, size = 0x4, offset = 0x4, fixed_abs, tag = 'smem constant byte address 0x4 - core index']
  #allocation1 [shape = 'u32[144,128]{1,0:T(1,128)}', space=vmem, size = 0x12000, scoped, tag = 'internal scratch']
  %s0 = inlined_call_operand.vmem [shape: bf16[256,64], index: 0, kind: input, shape index: {}]
  %s1 = inlined_call_operand.vmem [shape: bf16[64,32], index: 1, kind: input, shape index: {}]
  %s2 = inlined_call_operand.vmem [shape: f32[1,32], index: 2, kind: input, shape index: {}]
  %s3 = inlined_call_operand.vmem [shape: bf16[256,32], index: 3, kind: output, shape index: {}]
  %s4 = sld [smem:[#allocation0]]
  $region45: #{tpu_custom_call.1} parent=0
    _
  %s6 = ssub.s32 1, %s4
  %s7 = scalar_select 0, %s6, %s4
  loop: start=0, step=1, limit=4
  $region2: #{tpu_custom_call.1} parent=0 // loop_pre_header
    _
  $region3: #{tpu_custom_call.1} parent=0 // loop_header
    %s9 = sphi 0, %s13
    %p10 = scmp.ge.s32.totalorder %s9, 4
    %s19 = sphi 0, %s21
    %s22 = sphi 0, %s19
    %s23 = sphi 0, %s22
    %s39 = sphi 0, %s23
    %s43 = sphi 0, %s43
    %s45 = sphi 0, %s43
    %s46 = sphi 0, %s45
    %s60 = sphi 0, %s46
    %s64 = sphi 0, %s64
    %s66 = sphi 0, %s64
    %s67 = sphi 0, %s66
    %s81 = sphi 0, %s67
    %s87 = sphi 0, %s89
    %s90 = sphi 0, %s87
    %s91 = sphi 0, %s90
    %s107 = sphi 0, %s91
  $region4: #{tpu_custom_call.1} parent=0 // loop_header_branch
    %12 = sbr.rel (%p10) target = $region8
  $region5: #{tpu_custom_call.1} parent=0 // loop_body
    %s14 = ssub.s32 %s9, 1
    %s15 = ssub.s32 %s9, 2
    %s16 = sadd.s32 %s9, 1
    %s17 = ssub.s32 %s9, %s16
    %p18 = scmp.eq.s32.totalorder %s17, 0
    %s20 = sadd.s32 %s19, 1
    %s21 = scalar_select %p18, %s19, %s20
    %p24 = pneg %p18
    %p25 = scmp.eq.s32.totalorder %s9, 1
    %p26 = por %p24, %p25
    %p27 = scmp.ne.s32.totalorder %s19, %s22
    %p28 = scmp.eq.s32.totalorder %s9, 0
    %p29 = por %p27, %p28
    %p30 = scmp.ne.s32.totalorder %s19, %s22
    %p31 = scmp.eq.s32.totalorder %s14, 1
    %p32 = por %p30, %p31
    %p33 = scmp.ne.s32.totalorder %s22, %s23
    %p34 = scmp.eq.s32.totalorder %s14, 0
    %p35 = por %p33, %p34
    %p36 = scmp.ne.s32.totalorder %s22, %s23
    %p37 = scmp.eq.s32.totalorder %s15, 1
    %p38 = por %p36, %p37
    %p40 = scmp.ne.s32.totalorder %s23, %s39
    %p41 = scmp.eq.s32.totalorder %s15, 0
    %p42 = por %p40, %p41
    %s44 = sadd.s32 %s43, 1
    %p47 = scmp.eq.s32.totalorder %s9, 1
    %p48 = scmp.ne.s32.totalorder %s43, %s45
    %p49 = scmp.eq.s32.totalorder %s9, 0
    %p50 = por %p48, %p49
    %p51 = scmp.ne.s32.totalorder %s43, %s45
    %p52 = scmp.eq.s32.totalorder %s14, 1
    %p53 = por %p51, %p52
    %p54 = scmp.ne.s32.totalorder %s45, %s46
    %p55 = scmp.eq.s32.totalorder %s14, 0
    %p56 = por %p54, %p55
    %p57 = scmp.ne.s32.totalorder %s45, %s46
    %p58 = scmp.eq.s32.totalorder %s15, 1
    %p59 = por %p57, %p58
    %p61 = scmp.ne.s32.totalorder %s46, %s60
    %p62 = scmp.eq.s32.totalorder %s15, 0
    %p63 = por %p61, %p62
    %s65 = sadd.s32 %s64, 1
    %p68 = scmp.eq.s32.totalorder %s9, 1
    %p69 = scmp.ne.s32.totalorder %s64, %s66
    %p70 = scmp.eq.s32.totalorder %s9, 0
    %p71 = por %p69, %p70
    %p72 = scmp.ne.s32.totalorder %s64, %s66
    %p73 = scmp.eq.s32.totalorder %s14, 1
    %p74 = por %p72, %p73
    %p75 = scmp.ne.s32.totalorder %s66, %s67
    %p76 = scmp.eq.s32.totalorder %s14, 0
    %p77 = por %p75, %p76
    %p78 = scmp.ne.s32.totalorder %s66, %s67
    %p79 = scmp.eq.s32.totalorder %s15, 1
    %p80 = por %p78, %p79
    %p82 = scmp.ne.s32.totalorder %s67, %s81
    %p83 = scmp.eq.s32.totalorder %s15, 0
    %p84 = por %p82, %p83
    %s85 = ssub.s32 %s9, %s16
    %p86 = scmp.eq.s32.totalorder %s85, 0
    %s88 = sadd.s32 %s87, 1
    %s89 = scalar_select %p86, %s87, %s88
    %p92 = pneg %p86
    %p93 = scmp.eq.s32.totalorder %s9, 1
    %p94 = por %p92, %p93
    %p95 = scmp.ne.s32.totalorder %s87, %s90
    %p96 = scmp.eq.s32.totalorder %s9, 0
    %p97 = por %p95, %p96
    %p98 = scmp.ne.s32.totalorder %s87, %s90
    %p99 = scmp.eq.s32.totalorder %s14, 1
    %p100 = por %p98, %p99
    %p101 = scmp.ne.s32.totalorder %s90, %s91
    %p102 = scmp.eq.s32.totalorder %s14, 0
    %p103 = por %p101, %p102
    %p104 = scmp.ne.s32.totalorder %s90, %s91
    %p105 = scmp.eq.s32.totalorder %s15, 1
    %p106 = por %p104, %p105
    %p108 = scmp.ne.s32.totalorder %s91, %s107
    %p109 = scmp.eq.s32.totalorder %s15, 0
    %p110 = por %p108, %p109
    %p111 = scmp.le.s32.totalorder 1, %s9
    %p112 = scmp.lt.s32.totalorder %s9, 3
    %p113 = pnand %p111, %p112
    %p114 = pneg %p113
    // Predicated region
    $region9: #{tpu_custom_call.1} parent=5 // pred_check
      _
    $region10: #{tpu_custom_call.1} parent=5 // pred_check_branch
      %116 = sbr.rel (%p113) target = $region12
    $region11: #{tpu_custom_call.1} parent=5 // pred_region
      %s117 = ssub.s32 %s9, 1
      // Predicated region
      $region13: #{tpu_custom_call.1} parent=11 // pred_check
        %p118 = pneg %p56
      $region14: #{tpu_custom_call.1} parent=11 // pred_check_branch
        %120 = sbr.rel (%p118) target = $region16
      $region15: #{tpu_custom_call.1} parent=11 // pred_region
        _
      $region16: #{tpu_custom_call.1} parent=11 // pred_fallthru
        _
      // Predicated region
      $region17: #{tpu_custom_call.1} parent=11 // pred_check
        %p121 = pneg %p77
      $region18: #{tpu_custom_call.1} parent=11 // pred_check_branch
        %123 = sbr.rel (%p121) target = $region20
      $region19: #{tpu_custom_call.1} parent=11 // pred_region
        _
      $region20: #{tpu_custom_call.1} parent=11 // pred_fallthru
        _
    $region12: #{tpu_custom_call.1} parent=5 // pred_fallthru
      _
    %p124 = scmp.lt.s32.totalorder %s9, 2
    // Predicated region
    $region21: #{tpu_custom_call.1} parent=5 // pred_check
      %p125 = pneg %p124
    $region22: #{tpu_custom_call.1} parent=5 // pred_check_branch
      %127 = sbr.rel (%p125) target = $region24
    $region23: #{tpu_custom_call.1} parent=5 // pred_region
      // Predicated region
      $region25: #{tpu_custom_call.1} parent=23 // pred_check
        %p128 = pneg %p29
      $region26: #{tpu_custom_call.1} parent=23 // pred_check_branch
        %130 = sbr.rel (%p128) target = $region28
      $region27: #{tpu_custom_call.1} parent=23 // pred_region
        %s131 = smul.u32 16, %s9
        %p132 = scmp.lt.s32.totalorder %s131, 31
        %s133 = scalar_select %p132, %s131, 31
        %s134 = smul.addr %s133, 4
        %s135 = scalar_lea.vmem %s0, %s134
        %s136 = smul.u32 16, %s9
      $region28: #{tpu_custom_call.1} parent=23 // pred_fallthru
        _
    $region24: #{tpu_custom_call.1} parent=5 // pred_fallthru
      _
    %p137 = scmp.le.s32.totalorder 1, %s9
    %p138 = scmp.lt.s32.totalorder %s9, 3
    %p139 = pnand %p137, %p138
    %p140 = pneg %p139
    // Predicated region
    $region29: #{tpu_custom_call.1} parent=5 // pred_check
      _
    $region30: #{tpu_custom_call.1} parent=5 // pred_check_branch
      %142 = sbr.rel (%p139) target = $region32
    $region31: #{tpu_custom_call.1} parent=5 // pred_region
      %s143 = ssub.s32 %s9, 1
      %s144 = smul.u32 16, %s14
      %p145 = scmp.lt.s32.totalorder %s144, 31
      %s146 = scalar_select %p145, %s144, 31
      %s147 = smul.addr %s146, 4
      %s148 = scalar_lea.vmem %s0, %s147
      %p149 = pneg %p35
      %p150 = pneg %p32
      %p151 = pneg %p56
      %p152 = pneg %p53
      %p153 = pneg %p77
      %p154 = pneg %p74
      %p155 = pneg %p103
      %p156 = pneg %p100
      %s157 = smul.u32 16, %s14
      %p158 = scmp.lt.s32.totalorder %s157, 31
      %s159 = scalar_select %p158, %s157, 31
      %s160 = smul.addr %s159, 4
      %s161 = scalar_lea.vmem %s3, %s160
      %s162 = smul.u32 16, %s14
      %p163 = scmp.lt.s32.totalorder %s162, 31
      %s164 = scalar_select %p163, %s162, 31
      %s165 = smul.addr %s164, 4
      %s166 = scalar_lea.vmem %s0, %s165
      %s167 = smul.u32 16, %s14
      %s168 = smul.u32 16, %s14
      %p169 = scmp.lt.s32.totalorder %s168, 31
      %s170 = scalar_select %p169, %s168, 31
      %s171 = smul.addr %s170, 4
      %s172 = scalar_lea.vmem %s3, %s171
      %s173 = smul.u32 16, %s14
      %v175 = vld [vmem:[%s166] sm:$0xf]
      %v176 = vld [vmem:[%s166 + $0x4] sm:$0xf]
      %v177 = vld [vmem:[%s166 + $0x8] sm:$0xf]
      %v178 = vld [vmem:[%s166 + $0xc] sm:$0xf]
      %v179 = vld [vmem:[%s166 + $0x10] sm:$0xf]
      %v180 = vld [vmem:[%s166 + $0x14] sm:$0xf]
      %v181 = vld [vmem:[%s166 + $0x18] sm:$0xf]
      %v182 = vld [vmem:[%s166 + $0x1c] sm:$0xf]
      %v183 = vld [vmem:[%s166 + $0x20] sm:$0xf]
      %v184 = vld [vmem:[%s166 + $0x24] sm:$0xf]
      %v185 = vld [vmem:[%s166 + $0x28] sm:$0xf]
      %v186 = vld [vmem:[%s166 + $0x2c] sm:$0xf]
      %v187 = vld [vmem:[%s166 + $0x30] sm:$0xf]
      %v188 = vld [vmem:[%s166 + $0x34] sm:$0xf]
      %v189 = vld [vmem:[%s166 + $0x38] sm:$0xf]
      %v190 = vld [vmem:[%s166 + $0x3c] sm:$0xf]
      %v191 = vld [vmem:[%s1] sm:$0xf]
      %v192 = vld [vmem:[%s1 + $0x4] sm:$0xf]
      %v193 = vld [vmem:[%s1 + $0x8] sm:$0xf]
      %v194 = vld [vmem:[%s1 + $0xc] sm:$0xf]
      %v195 = vld [vmem:[%s1 + $0x10] sm:$0xf]
      %v196 = vld [vmem:[%s1 + $0x14] sm:$0xf]
      %v197 = vld [vmem:[%s1 + $0x18] sm:$0xf]
      %v198 = vld [vmem:[%s1 + $0x1c] sm:$0xf]
      %v199 = vld [vmem:[%s2] sm:$0x1]
      %v201 = vlaneseq
      %v202 = vshrl.u32 %v201, 7
      %v203 = vsub.s32 0, %v202
      %v204 = vrot.slane %v199, %v203
      %v222 = vunpack.c.l.b16 %v175
      %v223 = vunpack.c.l.b16 %v176
      %v224 = vunpack.c.l.b16 %v177
      %v225 = vunpack.c.l.b16 %v178
      %v226 = vunpack.c.l.b16 %v179
      %v227 = vunpack.c.l.b16 %v180
      %v228 = vunpack.c.l.b16 %v181
      %v229 = vunpack.c.l.b16 %v182
      %v230 = vunpack.c.l.b16 %v183
      %v231 = vunpack.c.l.b16 %v184
      %v232 = vunpack.c.l.b16 %v185
      %v233 = vunpack.c.l.b16 %v186
      %v234 = vunpack.c.l.b16 %v187
      %v235 = vunpack.c.l.b16 %v188
      %v236 = vunpack.c.l.b16 %v189
      %v237 = vunpack.c.l.b16 %v190
      %v238 = vpack.c.b16 %v223, %v222
      %v239 = vpack.c.b16 %v225, %v224
      %v240 = vpack.c.b16 %v227, %v226
      %v241 = vpack.c.b16 %v229, %v228
      %v242 = vpack.c.b16 %v231, %v230
      %v243 = vpack.c.b16 %v233, %v232
      %v244 = vpack.c.b16 %v235, %v234
      %v245 = vpack.c.b16 %v237, %v236
      %v254 = vunpack.c.l.b16 %v191
      %v255 = vunpack.c.l.b16 %v192
      %v256 = vunpack.c.l.b16 %v193
      %v257 = vunpack.c.l.b16 %v194
      %v258 = vunpack.c.l.b16 %v195
      %v259 = vunpack.c.l.b16 %v196
      %v260 = vunpack.c.l.b16 %v197
      %v261 = vunpack.c.l.b16 %v198
      %v262 = vpack.c.b16 %v255, %v254
      %v263 = vpack.c.b16 %v257, %v256
      %v264 = vpack.c.b16 %v259, %v258
      %v265 = vpack.c.b16 %v261, %v260
      %vm270 = vcmask 523264
      %v272 = vsel %vm270, %v238, 0
      %v275 = vsel %vm270, %v239, 0
      %v278 = vsel %vm270, %v240, 0
      %v281 = vsel %vm270, %v241, 0
      %v284 = vsel %vm270, %v242, 0
      %v287 = vsel %vm270, %v243, 0
      %v290 = vsel %vm270, %v244, 0
      %v293 = vsel %vm270, %v245, 0
      %295 = vmatprep.subr.bf16.mxu0 0
      %296 = vmatpush1.bf16.msra.mxu0 %v262
      %297 = vmatprep.subr.bf16.mxu0 0
      %298 = vmatpush1.bf16.msra.mxu0 %v263
      %299 = vmatprep.subr.bf16.mxu0 0
      %300 = vmatpush1.bf16.msra.mxu0 %v264
      %301 = vmatprep.subr.bf16.mxu0 0
      %302 = vmatpush1.bf16.msra.mxu0 %v265
      %303 = vmatprep.subr.bf16.mxu0 0
      %304 = vmatpush1.bf16.msra.mxu0 0
      %305 = vmatprep.subr.bf16.mxu0 0
      %306 = vmatpush1.bf16.msra.mxu0 0
      %307 = vmatprep.subr.bf16.mxu0 0
      %308 = vmatpush1.bf16.msra.mxu0 0
      %309 = vmatprep.subr.bf16.mxu0 0
      %310 = vmatpush1.bf16.msra.mxu0 0
      %311 = vmatprep.subr.bf16.mxu0 0
      %312 = vmatpush1.bf16.msra.mxu0 0
      %313 = vmatprep.subr.bf16.mxu0 0
      %314 = vmatpush1.bf16.msra.mxu0 0
      %315 = vmatprep.subr.bf16.mxu0 0
      %316 = vmatpush1.bf16.msra.mxu0 0
      %317 = vmatprep.subr.bf16.mxu0 0
      %318 = vmatpush1.bf16.msra.mxu0 0
      %319 = vmatprep.subr.bf16.mxu0 0
      %320 = vmatpush1.bf16.msra.mxu0 0
      %321 = vmatprep.subr.bf16.mxu0 0
      %322 = vmatpush1.bf16.msra.mxu0 0
      %323 = vmatprep.subr.bf16.mxu0 0
      %324 = vmatpush1.bf16.msra.mxu0 0
      %325 = vmatprep.subr.bf16.mxu0 0
      %326 = vmatpush1.bf16.msra.mxu0 0
      %327 = vmatprep.mubr.bf16.mxu0 0
      %328 = vmatmul.mubr.bf16.gmra.mrb[0].mxu0 %v272
      %v329 = vpop.f32.mrb[0].mxu0
      %v330 = vadd.f32 %v204, %v329
      %v331 = vpop.f32.mrb[0].mxu0
      %v332 = vpop.f32.mrb[0].mxu0
      %v333 = vadd.f32 %v204, %v332
      %v334 = vpop.f32.mrb[0].mxu0
      %335 = vmatprep.mubr.bf16.mxu0 0
      %336 = vmatmul.mubr.bf16.gmra.mrb[0].mxu0 %v275
      %v337 = vpop.f32.mrb[0].mxu0
      %v338 = vadd.f32 %v204, %v337
      %v339 = vpop.f32.mrb[0].mxu0
      %v340 = vpop.f32.mrb[0].mxu0
      %v341 = vadd.f32 %v204, %v340
      %v342 = vpop.f32.mrb[0].mxu0
      %343 = vmatprep.mubr.bf16.mxu0 0
      %344 = vmatmul.mubr.bf16.gmra.mrb[0].mxu0 %v278
      %v345 = vpop.f32.mrb[0].mxu0
      %v346 = vadd.f32 %v204, %v345
      %v347 = vpop.f32.mrb[0].mxu0
      %v348 = vpop.f32.mrb[0].mxu0
      %v349 = vadd.f32 %v204, %v348
      %v350 = vpop.f32.mrb[0].mxu0
      %351 = vmatprep.mubr.bf16.mxu0 0
      %352 = vmatmul.mubr.bf16.gmra.mrb[0].mxu0 %v281
      %v353 = vpop.f32.mrb[0].mxu0
      %v354 = vadd.f32 %v204, %v353
      %v355 = vpop.f32.mrb[0].mxu0
      %v356 = vpop.f32.mrb[0].mxu0
      %v357 = vadd.f32 %v204, %v356
      %v358 = vpop.f32.mrb[0].mxu0
      %359 = vmatprep.mubr.bf16.mxu0 0
      %360 = vmatmul.mubr.bf16.gmra.mrb[0].mxu0 %v284
      %v361 = vpop.f32.mrb[0].mxu0
      %v362 = vadd.f32 %v204, %v361
      %v363 = vpop.f32.mrb[0].mxu0
      %v364 = vpop.f32.mrb[0].mxu0
      %v365 = vadd.f32 %v204, %v364
      %v366 = vpop.f32.mrb[0].mxu0
      %367 = vmatprep.mubr.bf16.mxu0 0
      %368 = vmatmul.mubr.bf16.gmra.mrb[0].mxu0 %v287
      %v369 = vpop.f32.mrb[0].mxu0
      %v370 = vadd.f32 %v204, %v369
      %v371 = vpop.f32.mrb[0].mxu0
      %v372 = vpop.f32.mrb[0].mxu0
      %v373 = vadd.f32 %v204, %v372
      %v374 = vpop.f32.mrb[0].mxu0
      %375 = vmatprep.mubr.bf16.mxu0 0
      %376 = vmatmul.mubr.bf16.gmra.mrb[0].mxu0 %v290
      %v377 = vpop.f32.mrb[0].mxu0
      %v378 = vadd.f32 %v204, %v377
      %v379 = vpop.f32.mrb[0].mxu0
      %v380 = vpop.f32.mrb[0].mxu0
      %v381 = vadd.f32 %v204, %v380
      %v382 = vpop.f32.mrb[0].mxu0
      %383 = vmatprep.mubr.bf16.mxu0 0
      %384 = vmatmul.mubr.bf16.gmra.mrb[0].mxu0 %v293
      %v385 = vpop.f32.mrb[0].mxu0
      %v386 = vadd.f32 %v204, %v385
      %v387 = vpop.f32.mrb[0].mxu0
      %v388 = vpop.f32.mrb[0].mxu0
      %v389 = vadd.f32 %v204, %v388
      %v390 = vpop.f32.mrb[0].mxu0
      %391 = vdwg.mxu0
      %vm392 = vcmp.gt.f32.partialorder %v330, 0.0
      %vm393 = vcmp.gt.f32.partialorder %v333, 0.0
      %vm394 = vcmp.gt.f32.partialorder %v338, 0.0
      %vm395 = vcmp.gt.f32.partialorder %v341, 0.0
      %vm396 = vcmp.gt.f32.partialorder %v346, 0.0
      %vm397 = vcmp.gt.f32.partialorder %v349, 0.0
      %vm398 = vcmp.gt.f32.partialorder %v354, 0.0
      %vm399 = vcmp.gt.f32.partialorder %v357, 0.0
      %vm400 = vcmp.gt.f32.partialorder %v362, 0.0
      %vm401 = vcmp.gt.f32.partialorder %v365, 0.0
      %vm402 = vcmp.gt.f32.partialorder %v370, 0.0
      %vm403 = vcmp.gt.f32.partialorder %v373, 0.0
      %vm404 = vcmp.gt.f32.partialorder %v378, 0.0
      %vm405 = vcmp.gt.f32.partialorder %v381, 0.0
      %vm406 = vcmp.gt.f32.partialorder %v386, 0.0
      %vm407 = vcmp.gt.f32.partialorder %v389, 0.0
      %v408 = vmin.f32 %v330, 0.0
      %v409 = vmin.f32 %v333, 0.0
      %v410 = vmin.f32 %v338, 0.0
      %v411 = vmin.f32 %v341, 0.0
      %v412 = vmin.f32 %v346, 0.0
      %v413 = vmin.f32 %v349, 0.0
      %v414 = vmin.f32 %v354, 0.0
      %v415 = vmin.f32 %v357, 0.0
      %v416 = vmin.f32 %v362, 0.0
      %v417 = vmin.f32 %v365, 0.0
      %v418 = vmin.f32 %v370, 0.0
      %v419 = vmin.f32 %v373, 0.0
      %v420 = vmin.f32 %v378, 0.0
      %v421 = vmin.f32 %v381, 0.0
      %v422 = vmin.f32 %v386, 0.0
      %v423 = vmin.f32 %v389, 0.0
      %v424 = vmul.f32 %v408, 1.442695
      %v425 = vpow.pop %v424
      %v426 = vmul.f32 %v409, 1.442695
      %v427 = vpow.pop %v426
      %v428 = vmul.f32 %v410, 1.442695
      %v429 = vpow.pop %v428
      %v430 = vmul.f32 %v411, 1.442695
      %v431 = vpow.pop %v430
      %v432 = vmul.f32 %v412, 1.442695
      %v433 = vpow.pop %v432
      %v434 = vmul.f32 %v413, 1.442695
      %v435 = vpow.pop %v434
      %v436 = vmul.f32 %v414, 1.442695
      %v437 = vpow.pop %v436
      %v438 = vmul.f32 %v415, 1.442695
      %v439 = vpow.pop %v438
      %v440 = vmul.f32 %v416, 1.442695
      %v441 = vpow.pop %v440
      %v442 = vmul.f32 %v417, 1.442695
      %v443 = vpow.pop %v442
      %v444 = vmul.f32 %v418, 1.442695
      %v445 = vpow.pop %v444
      %v446 = vmul.f32 %v419, 1.442695
      %v447 = vpow.pop %v446
      %v448 = vmul.f32 %v420, 1.442695
      %v449 = vpow.pop %v448
      %v450 = vmul.f32 %v421, 1.442695
      %v451 = vpow.pop %v450
      %v452 = vmul.f32 %v422, 1.442695
      %v453 = vpow.pop %v452
      %v454 = vmul.f32 %v423, 1.442695
      %v455 = vpow.pop %v454
      %v456 = vsub.f32 %v425, 1.0
      %v457 = vsub.f32 %v427, 1.0
      %v458 = vsub.f32 %v429, 1.0
      %v459 = vsub.f32 %v431, 1.0
      %v460 = vsub.f32 %v433, 1.0
      %v461 = vsub.f32 %v435, 1.0
      %v462 = vsub.f32 %v437, 1.0
      %v463 = vsub.f32 %v439, 1.0
      %v464 = vsub.f32 %v441, 1.0
      %v465 = vsub.f32 %v443, 1.0
      %v466 = vsub.f32 %v445, 1.0
      %v467 = vsub.f32 %v447, 1.0
      %v468 = vsub.f32 %v449, 1.0
      %v469 = vsub.f32 %v451, 1.0
      %v470 = vsub.f32 %v453, 1.0
      %v471 = vsub.f32 %v455, 1.0
      %v472 = vsel %vm392, %v330, %v456
      %v473 = vsel %vm393, %v333, %v457
      %v474 = vsel %vm394, %v338, %v458
      %v475 = vsel %vm395, %v341, %v459
      %v476 = vsel %vm396, %v346, %v460
      %v477 = vsel %vm397, %v349, %v461
      %v478 = vsel %vm398, %v354, %v462
      %v479 = vsel %vm399, %v357, %v463
      %v480 = vsel %vm400, %v362, %v464
      %v481 = vsel %vm401, %v365, %v465
      %v482 = vsel %vm402, %v370, %v466
      %v483 = vsel %vm403, %v373, %v467
      %v484 = vsel %vm404, %v378, %v468
      %v485 = vsel %vm405, %v381, %v469
      %v486 = vsel %vm406, %v386, %v470
      %v487 = vsel %vm407, %v389, %v471
      %s488 = smul.u32 %s14, 128
      %v489 = vlaneseq
      %v490 = vshrl.u32 %v489, 7
      %v491 = vadd.s32 %v490, 8
      %v492 = vadd.s32 %v490, 16
      %v493 = vadd.s32 %v490, 24
      %v494 = vadd.s32 %v490, 32
      %v495 = vadd.s32 %v490, 40
      %v496 = vadd.s32 %v490, 48
      %v497 = vadd.s32 %v490, 56
      %v498 = vadd.s32 %v490, 64
      %v499 = vadd.s32 %v490, 72
      %v500 = vadd.s32 %v490, 80
      %v501 = vadd.s32 %v490, 88
      %v502 = vadd.s32 %v490, 96
      %v503 = vadd.s32 %v490, 104
      %v504 = vadd.s32 %v490, 112
      %v505 = vadd.s32 %v490, 120
      %v506 = vstv %s488
      %v507 = vadd.s32 %v506, %v490
      %v508 = vadd.s32 %v506, %v491
      %v509 = vadd.s32 %v506, %v492
      %v510 = vadd.s32 %v506, %v493
      %v511 = vadd.s32 %v506, %v494
      %v512 = vadd.s32 %v506, %v495
      %v513 = vadd.s32 %v506, %v496
      %v514 = vadd.s32 %v506, %v497
      %v515 = vadd.s32 %v506, %v498
      %v516 = vadd.s32 %v506, %v499
      %v517 = vadd.s32 %v506, %v500
      %v518 = vadd.s32 %v506, %v501
      %v519 = vadd.s32 %v506, %v502
      %v520 = vadd.s32 %v506, %v503
      %v521 = vadd.s32 %v506, %v504
      %v522 = vadd.s32 %v506, %v505
      %vm523 = vcmp.lt.s32.totalorder %v507, 0
      %v524 = vsub.s32 0, %v507
      %v525 = vsel %vm523, %v524, %v507
      %v526 = vshrl.u32 %v525, 7
      %v527 = vand.u32 %v525, 127
      %v528 = vsub.s32 0, %v527
      %v529 = vsel %vm523, %v528, %v527
      %vm530 = vcmp.lt.s32.totalorder %v508, 0
      %v531 = vsub.s32 0, %v508
      %v532 = vsel %vm530, %v531, %v508
      %v533 = vshrl.u32 %v532, 7
      %v534 = vand.u32 %v532, 127
      %v535 = vsub.s32 0, %v534
      %v536 = vsel %vm530, %v535, %v534
      %vm537 = vcmp.lt.s32.totalorder %v509, 0
      %v538 = vsub.s32 0, %v509
      %v539 = vsel %vm537, %v538, %v509
      %v540 = vshrl.u32 %v539, 7
      %v541 = vand.u32 %v539, 127
      %v542 = vsub.s32 0, %v541
      %v543 = vsel %vm537, %v542, %v541
      %vm544 = vcmp.lt.s32.totalorder %v510, 0
      %v545 = vsub.s32 0, %v510
      %v546 = vsel %vm544, %v545, %v510
      %v547 = vshrl.u32 %v546, 7
      %v548 = vand.u32 %v546, 127
      %v549 = vsub.s32 0, %v548
      %v550 = vsel %vm544, %v549, %v548
      %vm551 = vcmp.lt.s32.totalorder %v511, 0
      %v552 = vsub.s32 0, %v511
      %v553 = vsel %vm551, %v552, %v511
      %v554 = vshrl.u32 %v553, 7
      %v555 = vand.u32 %v553, 127
      %v556 = vsub.s32 0, %v555
      %v557 = vsel %vm551, %v556, %v555
      %vm558 = vcmp.lt.s32.totalorder %v512, 0
      %v559 = vsub.s32 0, %v512
      %v560 = vsel %vm558, %v559, %v512
      %v561 = vshrl.u32 %v560, 7
      %v562 = vand.u32 %v560, 127
      %v563 = vsub.s32 0, %v562
      %v564 = vsel %vm558, %v563, %v562
      %vm565 = vcmp.lt.s32.totalorder %v513, 0
      %v566 = vsub.s32 0, %v513
      %v567 = vsel %vm565, %v566, %v513
      %v568 = vshrl.u32 %v567, 7
      %v569 = vand.u32 %v567, 127
      %v570 = vsub.s32 0, %v569
      %v571 = vsel %vm565, %v570, %v569
      %vm572 = vcmp.lt.s32.totalorder %v514, 0
      %v573 = vsub.s32 0, %v514
      %v574 = vsel %vm572, %v573, %v514
      %v575 = vshrl.u32 %v574, 7
      %v576 = vand.u32 %v574, 127
      %v577 = vsub.s32 0, %v576
      %v578 = vsel %vm572, %v577, %v576
      %vm579 = vcmp.lt.s32.totalorder %v515, 0
      %v580 = vsub.s32 0, %v515
      %v581 = vsel %vm579, %v580, %v515
      %v582 = vshrl.u32 %v581, 7
      %v583 = vand.u32 %v581, 127
      %v584 = vsub.s32 0, %v583
      %v585 = vsel %vm579, %v584, %v583
      %vm586 = vcmp.lt.s32.totalorder %v516, 0
      %v587 = vsub.s32 0, %v516
      %v588 = vsel %vm586, %v587, %v516
      %v589 = vshrl.u32 %v588, 7
      %v590 = vand.u32 %v588, 127
      %v591 = vsub.s32 0, %v590
      %v592 = vsel %vm586, %v591, %v590
      %vm593 = vcmp.lt.s32.totalorder %v517, 0
      %v594 = vsub.s32 0, %v517
      %v595 = vsel %vm593, %v594, %v517
      %v596 = vshrl.u32 %v595, 7
      %v597 = vand.u32 %v595, 127
      %v598 = vsub.s32 0, %v597
      %v599 = vsel %vm593, %v598, %v597
      %vm600 = vcmp.lt.s32.totalorder %v518, 0
      %v601 = vsub.s32 0, %v518
      %v602 = vsel %vm600, %v601, %v518
      %v603 = vshrl.u32 %v602, 7
      %v604 = vand.u32 %v602, 127
      %v605 = vsub.s32 0, %v604
      %v606 = vsel %vm600, %v605, %v604
      %vm607 = vcmp.lt.s32.totalorder %v519, 0
      %v608 = vsub.s32 0, %v519
      %v609 = vsel %vm607, %v608, %v519
      %v610 = vshrl.u32 %v609, 7
      %v611 = vand.u32 %v609, 127
      %v612 = vsub.s32 0, %v611
      %v613 = vsel %vm607, %v612, %v611
      %vm614 = vcmp.lt.s32.totalorder %v520, 0
      %v615 = vsub.s32 0, %v520
      %v616 = vsel %vm614, %v615, %v520
      %v617 = vshrl.u32 %v616, 7
      %v618 = vand.u32 %v616, 127
      %v619 = vsub.s32 0, %v618
      %v620 = vsel %vm614, %v619, %v618
      %vm621 = vcmp.lt.s32.totalorder %v521, 0
      %v622 = vsub.s32 0, %v521
      %v623 = vsel %vm621, %v622, %v521
      %v624 = vshrl.u32 %v623, 7
      %v625 = vand.u32 %v623, 127
      %v626 = vsub.s32 0, %v625
      %v627 = vsel %vm621, %v626, %v625
      %vm628 = vcmp.lt.s32.totalorder %v522, 0
      %v629 = vsub.s32 0, %v522
      %v630 = vsel %vm628, %v629, %v522
      %v631 = vshrl.u32 %v630, 7
      %v632 = vand.u32 %v630, 127
      %v633 = vsub.s32 0, %v632
      %v634 = vsel %vm628, %v633, %v632
      %vm635 = vcmp.ne.s32.totalorder %v529, 0
      %vm636 = vcmp.ne.s32.totalorder %v536, 0
      %vm637 = vcmp.ne.s32.totalorder %v543, 0
      %vm638 = vcmp.ne.s32.totalorder %v550, 0
      %vm639 = vcmp.ne.s32.totalorder %v557, 0
      %vm640 = vcmp.ne.s32.totalorder %v564, 0
      %vm641 = vcmp.ne.s32.totalorder %v571, 0
      %vm642 = vcmp.ne.s32.totalorder %v578, 0
      %vm643 = vcmp.ne.s32.totalorder %v585, 0
      %vm644 = vcmp.ne.s32.totalorder %v592, 0
      %vm645 = vcmp.ne.s32.totalorder %v599, 0
      %vm646 = vcmp.ne.s32.totalorder %v606, 0
      %vm647 = vcmp.ne.s32.totalorder %v613, 0
      %vm648 = vcmp.ne.s32.totalorder %v620, 0
      %vm649 = vcmp.ne.s32.totalorder %v627, 0
      %vm650 = vcmp.ne.s32.totalorder %v634, 0
      %vm651 = vcmp.lt.s32.totalorder %v529, 0
      %vm652 = vcmp.lt.s32.totalorder %v536, 0
      %vm653 = vcmp.lt.s32.totalorder %v543, 0
      %vm654 = vcmp.lt.s32.totalorder %v550, 0
      %vm655 = vcmp.lt.s32.totalorder %v557, 0
      %vm656 = vcmp.lt.s32.totalorder %v564, 0
      %vm657 = vcmp.lt.s32.totalorder %v571, 0
      %vm658 = vcmp.lt.s32.totalorder %v578, 0
      %vm659 = vcmp.lt.s32.totalorder %v585, 0
      %vm660 = vcmp.lt.s32.totalorder %v592, 0
      %vm661 = vcmp.lt.s32.totalorder %v599, 0
      %vm662 = vcmp.lt.s32.totalorder %v606, 0
      %vm663 = vcmp.lt.s32.totalorder %v613, 0
      %vm664 = vcmp.lt.s32.totalorder %v620, 0
      %vm665 = vcmp.lt.s32.totalorder %v627, 0
      %vm666 = vcmp.lt.s32.totalorder %v634, 0
      %vm667 = vmand %vm651, %vm635
      %vm668 = vmand %vm652, %vm636
      %vm669 = vmand %vm653, %vm637
      %vm670 = vmand %vm654, %vm638
      %vm671 = vmand %vm655, %vm639
      %vm672 = vmand %vm656, %vm640
      %vm673 = vmand %vm657, %vm641
      %vm674 = vmand %vm658, %vm642
      %vm675 = vmand %vm659, %vm643
      %vm676 = vmand %vm660, %vm644
      %vm677 = vmand %vm661, %vm645
      %vm678 = vmand %vm662, %vm646
      %vm679 = vmand %vm663, %vm647
      %vm680 = vmand %vm664, %vm648
      %vm681 = vmand %vm665, %vm649
      %vm682 = vmand %vm666, %vm650
      %v683 = vadd.s32 %v529, 128
      %v684 = vadd.s32 %v536, 128
      %v685 = vadd.s32 %v543, 128
      %v686 = vadd.s32 %v550, 128
      %v687 = vadd.s32 %v557, 128
      %v688 = vadd.s32 %v564, 128
      %v689 = vadd.s32 %v571, 128
      %v690 = vadd.s32 %v578, 128
      %v691 = vadd.s32 %v585, 128
      %v692 = vadd.s32 %v592, 128
      %v693 = vadd.s32 %v599, 128
      %v694 = vadd.s32 %v606, 128
      %v695 = vadd.s32 %v613, 128
      %v696 = vadd.s32 %v620, 128
      %v697 = vadd.s32 %v627, 128
      %v698 = vadd.s32 %v634, 128
      %v699 = vsel %vm667, %v683, %v529
      %v700 = vsel %vm668, %v684, %v536
      %v701 = vsel %vm669, %v685, %v543
      %v702 = vsel %vm670, %v686, %v550
      %v703 = vsel %vm671, %v687, %v557
      %v704 = vsel %vm672, %v688, %v564
      %v705 = vsel %vm673, %v689, %v571
      %v706 = vsel %vm674, %v690, %v578
      %v707 = vsel %vm675, %v691, %v585
      %v708 = vsel %vm676, %v692, %v592
      %v709 = vsel %vm677, %v693, %v599
      %v710 = vsel %vm678, %v694, %v606
      %v711 = vsel %vm679, %v695, %v613
      %v712 = vsel %vm680, %v696, %v620
      %v713 = vsel %vm681, %v697, %v627
      %v714 = vsel %vm682, %v698, %v634
      %vm715 = vcmp.ne.s32.totalorder %v699, 127
      %vm716 = vcmp.ne.s32.totalorder %v700, 127
      %vm717 = vcmp.ne.s32.totalorder %v701, 127
      %vm718 = vcmp.ne.s32.totalorder %v702, 127
      %vm719 = vcmp.ne.s32.totalorder %v703, 127
      %vm720 = vcmp.ne.s32.totalorder %v704, 127
      %vm721 = vcmp.ne.s32.totalorder %v705, 127
      %vm722 = vcmp.ne.s32.totalorder %v706, 127
      %vm723 = vcmp.ne.s32.totalorder %v707, 127
      %vm724 = vcmp.ne.s32.totalorder %v708, 127
      %vm725 = vcmp.ne.s32.totalorder %v709, 127
      %vm726 = vcmp.ne.s32.totalorder %v710, 127
      %vm727 = vcmp.ne.s32.totalorder %v711, 127
      %vm728 = vcmp.ne.s32.totalorder %v712, 127
      %vm729 = vcmp.ne.s32.totalorder %v713, 127
      %vm730 = vcmp.ne.s32.totalorder %v714, 127
      %v731 = vsel %vm715, 1, 0
      %v732 = vsel %vm716, 1, 0
      %v733 = vsel %vm717, 1, 0
      %v734 = vsel %vm718, 1, 0
      %v735 = vsel %vm719, 1, 0
      %v736 = vsel %vm720, 1, 0
      %v737 = vsel %vm721, 1, 0
      %v738 = vsel %vm722, 1, 0
      %v739 = vsel %vm723, 1, 0
      %v740 = vsel %vm724, 1, 0
      %v741 = vsel %vm725, 1, 0
      %v742 = vsel %vm726, 1, 0
      %v743 = vsel %vm727, 1, 0
      %v744 = vsel %vm728, 1, 0
      %v745 = vsel %vm729, 1, 0
      %v746 = vsel %vm730, 1, 0
      %vm747 = vcmp.eq.s32.totalorder %v731, 1
      %vm748 = vcmp.eq.s32.totalorder %v732, 1
      %vm749 = vcmp.eq.s32.totalorder %v733, 1
      %vm750 = vcmp.eq.s32.totalorder %v734, 1
      %vm751 = vcmp.eq.s32.totalorder %v735, 1
      %vm752 = vcmp.eq.s32.totalorder %v736, 1
      %vm753 = vcmp.eq.s32.totalorder %v737, 1
      %vm754 = vcmp.eq.s32.totalorder %v738, 1
      %vm755 = vcmp.eq.s32.totalorder %v739, 1
      %vm756 = vcmp.eq.s32.totalorder %v740, 1
      %vm757 = vcmp.eq.s32.totalorder %v741, 1
      %vm758 = vcmp.eq.s32.totalorder %v742, 1
      %vm759 = vcmp.eq.s32.totalorder %v743, 1
      %vm760 = vcmp.eq.s32.totalorder %v744, 1
      %vm761 = vcmp.eq.s32.totalorder %v745, 1
      %vm762 = vcmp.eq.s32.totalorder %v746, 1
      %v763 = vsel %vm747, %v472, 0.0
      %v764 = vsel %vm748, %v473, 0.0
      %v765 = vsel %vm749, %v474, 0.0
      %v766 = vsel %vm750, %v475, 0.0
      %v767 = vsel %vm751, %v476, 0.0
      %v768 = vsel %vm752, %v477, 0.0
      %v769 = vsel %vm753, %v478, 0.0
      %v770 = vsel %vm754, %v479, 0.0
      %v771 = vsel %vm755, %v480, 0.0
      %v772 = vsel %vm756, %v481, 0.0
      %v773 = vsel %vm757, %v482, 0.0
      %v774 = vsel %vm758, %v483, 0.0
      %v775 = vsel %vm759, %v484, 0.0
      %v776 = vsel %vm760, %v485, 0.0
      %v777 = vsel %vm761, %v486, 0.0
      %v778 = vsel %vm762, %v487, 0.0
      %v779 = vpack.c.bf16 %v764, %v763
      %v780 = vpack.c.bf16 %v766, %v765
      %v781 = vpack.c.bf16 %v768, %v767
      %v782 = vpack.c.bf16 %v770, %v769
      %v783 = vpack.c.bf16 %v772, %v771
      %v784 = vpack.c.bf16 %v774, %v773
      %v785 = vpack.c.bf16 %v776, %v775
      %v786 = vpack.c.bf16 %v778, %v777
      %v795 = vunpack.c.l.b16 %v779
      %v796 = vunpack.c.h.b16 %v779
      %v797 = vunpack.c.l.b16 %v780
      %v798 = vunpack.c.h.b16 %v780
      %v799 = vunpack.c.l.b16 %v781
      %v800 = vunpack.c.h.b16 %v781
      %v801 = vunpack.c.l.b16 %v782
      %v802 = vunpack.c.h.b16 %v782
      %v803 = vunpack.c.l.b16 %v783
      %v804 = vunpack.c.h.b16 %v783
      %v805 = vunpack.c.l.b16 %v784
      %v806 = vunpack.c.h.b16 %v784
      %v807 = vunpack.c.l.b16 %v785
      %v808 = vunpack.c.h.b16 %v785
      %v809 = vunpack.c.l.b16 %v786
      %v810 = vunpack.c.h.b16 %v786
      %v811 = vpack.c.b16 %v795, %v795
      %v812 = vpack.c.b16 %v796, %v796
      %v813 = vpack.c.b16 %v797, %v797
      %v814 = vpack.c.b16 %v798, %v798
      %v815 = vpack.c.b16 %v799, %v799
      %v816 = vpack.c.b16 %v800, %v800
      %v817 = vpack.c.b16 %v801, %v801
      %v818 = vpack.c.b16 %v802, %v802
      %v819 = vpack.c.b16 %v803, %v803
      %v820 = vpack.c.b16 %v804, %v804
      %v821 = vpack.c.b16 %v805, %v805
      %v822 = vpack.c.b16 %v806, %v806
      %v823 = vpack.c.b16 %v807, %v807
      %v824 = vpack.c.b16 %v808, %v808
      %v825 = vpack.c.b16 %v809, %v809
      %v826 = vpack.c.b16 %v810, %v810
      %vm843 = vcmask 257024
      %844 = vst.msk [vmem:[%s172] sm:$0xf] %vm843, %v811
      %845 = vst.msk [vmem:[%s172 + $0x4] sm:$0xf] %vm843, %v812
      %846 = vst.msk [vmem:[%s172 + $0x8] sm:$0xf] %vm843, %v813
      %847 = vst.msk [vmem:[%s172 + $0xc] sm:$0xf] %vm843, %v814
      %848 = vst.msk [vmem:[%s172 + $0x10] sm:$0xf] %vm843, %v815
      %849 = vst.msk [vmem:[%s172 + $0x14] sm:$0xf] %vm843, %v816
      %850 = vst.msk [vmem:[%s172 + $0x18] sm:$0xf] %vm843, %v817
      %851 = vst.msk [vmem:[%s172 + $0x1c] sm:$0xf] %vm843, %v818
      %852 = vst.msk [vmem:[%s172 + $0x20] sm:$0xf] %vm843, %v819
      %853 = vst.msk [vmem:[%s172 + $0x24] sm:$0xf] %vm843, %v820
      %854 = vst.msk [vmem:[%s172 + $0x28] sm:$0xf] %vm843, %v821
      %855 = vst.msk [vmem:[%s172 + $0x2c] sm:$0xf] %vm843, %v822
      %856 = vst.msk [vmem:[%s172 + $0x30] sm:$0xf] %vm843, %v823
      %857 = vst.msk [vmem:[%s172 + $0x34] sm:$0xf] %vm843, %v824
      %858 = vst.msk [vmem:[%s172 + $0x38] sm:$0xf] %vm843, %v825
      %859 = vst.msk [vmem:[%s172 + $0x3c] sm:$0xf] %vm843, %v826
      %s860 = smul.u32 16, %s14
      %p861 = scmp.lt.s32.totalorder %s860, 31
      %s862 = scalar_select %p861, %s860, 31
      %s863 = smul.addr %s862, 4
      %s864 = scalar_lea.vmem %s3, %s863
      // Predicated region
      $region33: #{tpu_custom_call.1} parent=31 // pred_check
        %p865 = pneg %p100
      $region34: #{tpu_custom_call.1} parent=31 // pred_check_branch
        %867 = sbr.rel (%p865) target = $region36
      $region35: #{tpu_custom_call.1} parent=31 // pred_region
        %s868 = smul.u32 16, %s14
      $region36: #{tpu_custom_call.1} parent=31 // pred_fallthru
        _
    $region32: #{tpu_custom_call.1} parent=5 // pred_fallthru
      _
    %p869 = scmp.le.s32.totalorder 2, %s9
    // Predicated region
    $region37: #{tpu_custom_call.1} parent=5 // pred_check
      %p870 = pneg %p869
    $region38: #{tpu_custom_call.1} parent=5 // pred_check_branch
      %872 = sbr.rel (%p870) target = $region40
    $region39: #{tpu_custom_call.1} parent=5 // pred_region
      %s873 = ssub.s32 %s9, 2
      // Predicated region
      $region41: #{tpu_custom_call.1} parent=39 // pred_check
        %p874 = pneg %p106
      $region42: #{tpu_custom_call.1} parent=39 // pred_check_branch
        %876 = sbr.rel (%p874) target = $region44
      $region43: #{tpu_custom_call.1} parent=39 // pred_region
        %s877 = smul.u32 16, %s15
        %p878 = scmp.lt.s32.totalorder %s877, 31
        %s879 = scalar_select %p878, %s877, 31
        %s880 = smul.addr %s879, 4
        %s881 = scalar_lea.vmem %s3, %s880
      $region44: #{tpu_custom_call.1} parent=39 // pred_fallthru
        _
    $region40: #{tpu_custom_call.1} parent=5 // pred_fallthru
      _
  $region6: #{tpu_custom_call.1} parent=0 // loop_footer
    %s13 = sadd.s32 1, %s9
  $region7: #{tpu_custom_call.1} parent=0 // loop_footer_branch
    %8 = sbr.rel target = $region3
  $region8: #{tpu_custom_call.1} parent=0 // loop_exit
    _

</llo_original>
